<compile_context>
chip_gen: v5e
topology: v5e:2x2
jax: 0.10.0
libtpu: 0.0.40
codegen_flags: <defaults>
</compile_context>

<pallas_src>
import numpy as np
import jax
import jax.numpy as jnp
from jax.experimental import pallas as pl
from jax.experimental.pallas import tpu as pltpu

ALPHA = 4
_LANE = 128
# Per-slow-frame cutoff: below this many bytes per gathered frame the
# pallas_call per-step overhead dominates the copy -> use XLA's native gather.
_MIN_PALLAS_FRAME_BYTES = 256 * 1024


def _slow_indices(T: int, n_slow: int) -> np.ndarray:
    """torch.linspace(0, T-1, n_slow).long() — evenly spaced, truncated toward 0.

    NOTE: torch computes the linspace in float32; float64 linspace + trunc
    matches it for all realistic clip lengths (divergence would need T large
    enough for float32 rounding to cross an integer boundary).
    """
    if n_slow <= 0:
        return np.zeros((0,), dtype=np.int32)
    return np.trunc(np.linspace(0.0, float(T - 1), n_slow)).astype(np.int32)


def _tensorcores_per_chip() -> int:
    """v7x has 2 TensorCores per chip; v5e/v6e have 1."""
    try:
        kind = jax.devices()[0].device_kind.lower()
    except Exception:
        return 1
    return 2 if "v7" in kind else 1


def _gather_copy_kernel(idx_ref, frames_ref, out_ref):
    # frames_ref is the temporal slice selected by the data-dependent
    # index_map for this grid step; copy it into output slot i.
    del idx_ref  # consumed by the index_maps only
    out_ref[...] = frames_ref[...]


def _slow_pathway_pallas(frames: jax.Array, idx: np.ndarray) -> jax.Array:
    """Temporal gather frames[:, idx] via a Pallas kernel.  frames: (C,T,H,W)."""
    C, T, H, W = frames.shape
    n_slow = int(idx.shape[0])
    HW = H * W
    itemsize = jnp.dtype(frames.dtype).itemsize

    if HW % _LANE == 0:
        # Lane- and sublane-dense layout: each gathered frame is one
        # (C, 1, HW//128, 128) block -> unmasked full-rate vld/vst, minimal
        # VMEM per pipeline buffer, long contiguous DMA segments.
        # (Block last-two dims equal the full array dims, so this is legal for
        # any dtype; sub-32-bit dtypes just see a little sublane pad.)
        sub = HW // _LANE
        frames4 = frames.reshape(C, T, sub, _LANE)
        blk = (C, 1, sub, _LANE)
        out_struct = jax.ShapeDtypeStruct((C, n_slow, sub, _LANE), frames.dtype)
    else:
        # Fallback when HW isn't a multiple of 128: keep the natural (H, W)
        # minor dims.  Correct; lane dim may be padded/masked.
        frames4 = frames
        blk = (C, 1, H, W)
        out_struct = jax.ShapeDtypeStruct((C, n_slow, H, W), frames.dtype)

    idx_dev = jnp.asarray(idx, dtype=jnp.int32)

    grid_spec = pltpu.PrefetchScalarGridSpec(
        num_scalar_prefetch=1,  # idx lands in SMEM and feeds the index_maps
        grid=(n_slow,),
        in_specs=[
            pl.BlockSpec(blk, lambda i, idx_ref: (0, idx_ref[i], 0, 0)),
        ],
        out_specs=pl.BlockSpec(blk, lambda i, idx_ref: (0, i, 0, 0)),
    )

    # Only CORE_PARALLEL actually splits a grid axis across TensorCores; each
    # step writes a disjoint output slice, so it is safe on v7x.  On
    # single-TC chips (v5e/v6e) use plain "parallel" (codegen no-op).
    if _tensorcores_per_chip() > 1:
        dim_sem = (pltpu.CORE_PARALLEL,)
    else:
        dim_sem = ("parallel",)

    slow4 = pl.pallas_call(
        _gather_copy_kernel,
        out_shape=out_struct,
        grid_spec=grid_spec,
        compiler_params=pltpu.CompilerParams(dimension_semantics=dim_sem),
        cost_estimate=pl.CostEstimate(
            flops=0,
            transcendentals=0,
            bytes_accessed=2 * n_slow * C * HW * itemsize,  # read + write
        ),
    )(idx_dev, frames4)

    return slow4.reshape(C, n_slow, H, W)


def pack_pathway(frames: jax.Array, *, use_pallas=None):
    """frames: (C, T, H, W). Returns [slow_pathway, fast_pathway].

    use_pallas: None -> auto (Pallas only when each gathered frame is big
                enough to amortize per-grid-step overhead),
                True -> force the Pallas gather, False -> always jnp.take.
    """
    C, T, H, W = frames.shape
    n_slow = T // ALPHA
    idx = _slow_indices(T, n_slow)

    fast = frames  # identity pathway — pure aliasing, no compute

    frame_bytes = C * H * W * jnp.dtype(frames.dtype).itemsize
    if use_pallas is None:
        use_pallas = frame_bytes >= _MIN_PALLAS_FRAME_BYTES
    if n_slow == 0:
        use_pallas = False  # degenerate: empty gather, no grid to run

    if use_pallas:
        slow = _slow_pathway_pallas(frames, idx)
    else:
        slow = jnp.take(frames, jnp.asarray(idx, dtype=jnp.int32), axis=1)
    return [slow, fast]


if __name__ == "__main__":
    key = jax.random.PRNGKey(0)
    C, T, H, W = 3, 8, 16, 16  # small clip: 3 channels, 8 frames, 16x16
    frames = jax.random.normal(key, (C, T, H, W), dtype=jnp.float32)

    # Force the Pallas path so the kernel is exercised even at test scale.
    slow, fast = pack_pathway(frames, use_pallas=True)
    jax.block_until_ready(slow)
    jax.block_until_ready(fast)

    # Reference: torch.linspace(0, T-1, T//alpha).long() gather semantics.
    n_slow = T // ALPHA
    ref_idx = np.trunc(np.linspace(0.0, float(T - 1), n_slow)).astype(np.int32)
    ref_slow = jnp.take(frames, jnp.asarray(ref_idx), axis=1)

    assert slow.shape == (C, n_slow, H, W)
    assert fast.shape == frames.shape
    assert np.array_equal(_slow_indices(T, n_slow), ref_idx)
    assert jnp.allclose(slow, ref_slow)
    assert jnp.allclose(fast, frames)

    # Auto-dispatch (tiny clip -> jnp.take fast path) must agree with the kernel.
    slow_auto, fast_auto = pack_pathway(frames)
    jax.block_until_ready(slow_auto)
    assert jnp.allclose(slow_auto, ref_slow)
    assert jnp.allclose(fast_auto, frames)

    print("KERNEL_OK")
</pallas_src>

<mosaic_0001>
module attributes {stable_mosaic.version = 11 : i64} {
  func.func @_gather_copy_kernel(%arg0: i32, %arg1: memref<2xi32, #tpu.memory_space<smem>>, %arg2: memref<3x1x2x128xf32, #tpu.memory_space<vmem>>, %arg3: memref<3x1x2x128xf32, #tpu.memory_space<vmem>>) attributes {dimension_semantics = [#tpu.dimension_semantics<parallel>], iteration_bounds = array<i64: 2>, scalar_prefetch = 1 : i64, scratch_operands = 0 : i64, tpu.core_type = #tpu.core_type<tc>, window_params = [{transform_indices = @transform_0, window_bounds = array<i64: 3, 1, 2, 128>}, {transform_indices = @transform_1, window_bounds = array<i64: 3, 1, 2, 128>}]} {
    %c0 = arith.constant 0 : index
    %c0_0 = arith.constant 0 : index
    %c0_1 = arith.constant 0 : index
    %c0_2 = arith.constant 0 : index
    %0 = vector.load %arg2[%c0, %c0_0, %c0_1, %c0_2] : memref<3x1x2x128xf32, #tpu.memory_space<vmem>>, vector<3x1x2x128xf32>
    %c0_3 = arith.constant 0 : index
    %c0_4 = arith.constant 0 : index
    %c0_5 = arith.constant 0 : index
    %c0_6 = arith.constant 0 : index
    %1 = vector.load %arg3[%c0_3, %c0_4, %c0_5, %c0_6] : memref<3x1x2x128xf32, #tpu.memory_space<vmem>>, vector<3x1x2x128xf32>
    tpu.vector_store %arg3[%c0_3, %c0_4, %c0_5, %c0_6], %0 {strides = array<i32>} : memref<3x1x2x128xf32, #tpu.memory_space<vmem>>, vector<3x1x2x128xf32>,
    return
  }
  func.func @transform_0(%arg0: i32, %arg1: memref<2xi32, #tpu.memory_space<smem>>) -> (i32, i32, i32, i32) {
    %0 = arith.index_cast %arg0 : i32 to index
    %1 = memref.load %arg1[%0] : memref<2xi32, #tpu.memory_space<smem>>
    %c0_i32 = arith.constant 0 : i32
    %c0_i32_0 = arith.constant 0 : i32
    %c0_i32_1 = arith.constant 0 : i32
    %c0_i32_2 = arith.constant 0 : i32
    return %c0_i32, %1, %c0_i32_0, %c0_i32_1 : i32, i32, i32, i32
  }
  func.func @transform_1(%arg0: i32, %arg1: memref<2xi32, #tpu.memory_space<smem>>) -> (i32, i32, i32, i32) {
    %c0_i32 = arith.constant 0 : i32
    %c0_i32_0 = arith.constant 0 : i32
    %c0_i32_1 = arith.constant 0 : i32
    %c0_i32_2 = arith.constant 0 : i32
    return %c0_i32, %arg0, %c0_i32_0, %c0_i32_1 : i32, i32, i32, i32
  }
}

</mosaic_0001>

<llo_original>
// kernel: tpu_custom_call.1
$region0: #{tpu_custom_call.1}
  #allocation0 [shape = 'u32[]', space=smem, size = 0x4, offset = 0x4, fixed_abs, tag = 'smem constant byte address 0x4 - core index']
  #allocation1 [shape = 'u32[72,128]{1,0:T(1,128)}', space=vmem, size = 0x9000, scoped, tag = 'internal scratch']
  #allocation2 [shape = 's32[1]{0}', space=sflag, size = 0x4, scoped, tag = 'scoped memory for tpu_custom_call.1']
  #allocation3 [shape = 'u8[512]{0}', space=smem, size = 0x200, scoped, tag = 'prefetched SMEM operand 0']
  %s0 = inlined_call_operand.hbm [shape: s32[2], index: 0, kind: input, shape index: {}]
  %s1 = inlined_call_operand.hbm [shape: f32[3,8,2,128], index: 1, kind: input, shape index: {}]
  %s2 = inlined_call_operand.hbm [shape: f32[3,2,2,128], index: 2, kind: output, shape index: {}]
  %s3 = sld [smem:[#allocation0]]
  $region41: #{tpu_custom_call.1} parent=0
    _
  %s5 = ssub.s32 1, %s3
  %s6 = scalar_select 0, %s5, %s3
  %s8 = sshll.u32 %s0, 4
  %s9 = int_to_ptr.hbm [resolvable:$true] %s8
  %11 = dma.hbm_to_smem %s9, 16, [#allocation3], [#allocation2]
  %13 = dma.done [#allocation2], 16
  %14 = sfence
  $region1: #{tpu_custom_call.1} parent=0
    #allocation4 [shape = 'u8[6144]{0}', space=vmem, size = 0x1800, scoped, tag = 'input window, operand 1']
    #allocation5 [shape = 's32[2]{0}', space=sflag, size = 0x8, scoped, tag = 'scoped memory for tpu_custom_call.1']
    #allocation6 [shape = 's32[2]{0}', space=sflag, size = 0x8, scoped, tag = 'scoped memory for tpu_custom_call.1']
    #allocation7 [shape = 'u8[6144]{0}', space=vmem, size = 0x1800, scoped, tag = 'output window, operand 0']
    %15 = vsyncpa [#allocation5], 0
    %s16 = scalar_lea.sflag [#allocation5], 1
    %17 = vsyncpa %s16, 0
    %18 = vsyncpa [#allocation6], 0
    %s19 = scalar_lea.sflag [#allocation6], 1
    %20 = vsyncpa %s19, 0
    loop: start=0, step=1, limit=4
    $region2: #{tpu_custom_call.1} parent=1 // loop_pre_header
      _
    $region3: #{tpu_custom_call.1} parent=1 // loop_header
      %s22 = sphi 0, %s26
      %p23 = scmp.ge.s32.totalorder %s22, 4
      %s34 = sphi 0, %s36
      %s37 = sphi 0, %s34
      %s38 = sphi 0, %s37
      %s54 = sphi 0, %s38
      %s60 = sphi 0, %s62
      %s63 = sphi 0, %s60
      %s64 = sphi 0, %s63
      %s80 = sphi 0, %s64
    $region4: #{tpu_custom_call.1} parent=1 // loop_header_branch
      %25 = sbr.rel (%p23) target = $region8
    $region5: #{tpu_custom_call.1} parent=1 // loop_body
      %s27 = ssub.s32 %s22, 1
      %s28 = ssub.s32 %s22, 2
      %s29 = sadd.s32 %s22, 1
      %s30 = sld [smem:[#allocation3 + %s22]]
      %s31 = sld [smem:[#allocation3 + %s29]]
      %s32 = ssub.s32 %s30, %s31
      %p33 = scmp.eq.s32.totalorder %s32, 0
      %s35 = sadd.s32 %s34, 1
      %s36 = scalar_select %p33, %s34, %s35
      %p39 = pneg %p33
      %p40 = scmp.eq.s32.totalorder %s22, 1
      %p41 = por %p39, %p40
      %p42 = scmp.ne.s32.totalorder %s34, %s37
      %p43 = scmp.eq.s32.totalorder %s22, 0
      %p44 = por %p42, %p43
      %p45 = scmp.ne.s32.totalorder %s34, %s37
      %p46 = scmp.eq.s32.totalorder %s27, 1
      %p47 = por %p45, %p46
      %p48 = scmp.ne.s32.totalorder %s37, %s38
      %p49 = scmp.eq.s32.totalorder %s27, 0
      %p50 = por %p48, %p49
      %p51 = scmp.ne.s32.totalorder %s37, %s38
      %p52 = scmp.eq.s32.totalorder %s28, 1
      %p53 = por %p51, %p52
      %p55 = scmp.ne.s32.totalorder %s38, %s54
      %p56 = scmp.eq.s32.totalorder %s28, 0
      %p57 = por %p55, %p56
      %s58 = ssub.s32 %s22, %s29
      %p59 = scmp.eq.s32.totalorder %s58, 0
      %s61 = sadd.s32 %s60, 1
      %s62 = scalar_select %p59, %s60, %s61
      %p65 = pneg %p59
      %p66 = scmp.eq.s32.totalorder %s22, 1
      %p67 = por %p65, %p66
      %p68 = scmp.ne.s32.totalorder %s60, %s63
      %p69 = scmp.eq.s32.totalorder %s22, 0
      %p70 = por %p68, %p69
      %p71 = scmp.ne.s32.totalorder %s60, %s63
      %p72 = scmp.eq.s32.totalorder %s27, 1
      %p73 = por %p71, %p72
      %p74 = scmp.ne.s32.totalorder %s63, %s64
      %p75 = scmp.eq.s32.totalorder %s27, 0
      %p76 = por %p74, %p75
      %p77 = scmp.ne.s32.totalorder %s63, %s64
      %p78 = scmp.eq.s32.totalorder %s28, 1
      %p79 = por %p77, %p78
      %p81 = scmp.ne.s32.totalorder %s64, %s80
      %p82 = scmp.eq.s32.totalorder %s28, 0
      %p83 = por %p81, %p82
      %p84 = scmp.le.s32.totalorder 1, %s22
      %p85 = scmp.lt.s32.totalorder %s22, 3
      %p86 = pnand %p84, %p85
      %p87 = pneg %p86
      // Predicated region
      $region9: #{tpu_custom_call.1} parent=5 // pred_check
        _
      $region10: #{tpu_custom_call.1} parent=5 // pred_check_branch
        %89 = sbr.rel (%p86) target = $region12
      $region11: #{tpu_custom_call.1} parent=5 // pred_region
        %s90 = ssub.s32 %s22, 1
      $region12: #{tpu_custom_call.1} parent=5 // pred_fallthru
        _
      %p91 = scmp.lt.s32.totalorder %s22, 2
      // Predicated region
      $region13: #{tpu_custom_call.1} parent=5 // pred_check
        %p92 = pneg %p91
      $region14: #{tpu_custom_call.1} parent=5 // pred_check_branch
        %94 = sbr.rel (%p92) target = $region16
      $region15: #{tpu_custom_call.1} parent=5 // pred_region
        // Predicated region
        $region17: #{tpu_custom_call.1} parent=15 // pred_check
          %p95 = pneg %p44
        $region18: #{tpu_custom_call.1} parent=15 // pred_check_branch
          %97 = sbr.rel (%p95) target = $region20
        $region19: #{tpu_custom_call.1} parent=15 // pred_region
          %s98 = sand.u32 %s34, 1
          %s99 = scalar_lea.sflag [#allocation5], %s98
          %s100 = sand.u32 %s34, 1
          %s101 = smul.addr %s100, 6
          %s102 = scalar_lea.vmem [#allocation4], %s101
          %s103 = sld [smem:[#allocation3 + %s22]]
          %105 = vsyncadd %s99, 0
          %s106 = smul.addr %s103, 2
          %s107 = scalar_lea.hbm %s1, %s106
          %s108 = sshll.u32 %s107, 4
          %s109 = int_to_ptr.hbm [resolvable:$true] %s108
          %s110 = sshll.u32 %s102, 4
          %s111 = int_to_ptr.vmem [resolvable:$true] %s110
          %116 = dma.hbm_to_vmem [thread:$0]  %s109, 96, %s111, %s99, 256, 32, 2
        $region20: #{tpu_custom_call.1} parent=15 // pred_fallthru
          _
      $region16: #{tpu_custom_call.1} parent=5 // pred_fallthru
        _
      %p117 = scmp.le.s32.totalorder 1, %s22
      %p118 = scmp.lt.s32.totalorder %s22, 3
      %p119 = pnand %p117, %p118
      %p120 = pneg %p119
      // Predicated region
      $region21: #{tpu_custom_call.1} parent=5 // pred_check
        _
      $region22: #{tpu_custom_call.1} parent=5 // pred_check_branch
        %122 = sbr.rel (%p119) target = $region24
      $region23: #{tpu_custom_call.1} parent=5 // pred_region
        %s123 = ssub.s32 %s22, 1
        %s124 = sand.u32 %s37, 1
        %s125 = scalar_lea.sflag [#allocation5], %s124
        %s126 = sand.u32 %s37, 1
        %s127 = smul.addr %s126, 6
        %s128 = scalar_lea.vmem [#allocation4], %s127
        // Predicated region
        $region25: #{tpu_custom_call.1} parent=23 // pred_check
          %p129 = pneg %p50
        $region26: #{tpu_custom_call.1} parent=23 // pred_check_branch
          %131 = sbr.rel (%p129) target = $region28
        $region27: #{tpu_custom_call.1} parent=23 // pred_region
          %133 = dma.done %s125, 96
        $region28: #{tpu_custom_call.1} parent=23 // pred_fallthru
          _
        %s134 = sand.u32 %s37, 1
        %s135 = scalar_lea.sflag [#allocation5], %s134
        %s136 = sand.u32 %s37, 1
        %s137 = smul.addr %s136, 6
        %s138 = scalar_lea.vmem [#allocation4], %s137
        %p139 = pneg %p50
        %p140 = pneg %p47
        %p141 = pneg %p76
        %p142 = pneg %p73
        %s143 = sand.u32 %s63, 1
        %s144 = scalar_lea.sflag [#allocation6], %s143
        %s145 = sand.u32 %s63, 1
        %s146 = smul.addr %s145, 6
        %s147 = scalar_lea.vmem [#allocation7], %s146
        %s148 = sld [smem:[#allocation3 + %s27]]
        %v149 = vld [vmem:[%s128] sm:$0x3]
        %v150 = vld [vmem:[%s128 + $0x2] sm:$0x3]
        %v151 = vld [vmem:[%s128 + $0x4] sm:$0x3]
        %152 = vst [vmem:[%s147] sm:$0x3] %v149
        %153 = vst [vmem:[%s147 + $0x2] sm:$0x3] %v150
        %154 = vst [vmem:[%s147 + $0x4] sm:$0x3] %v151
        %s155 = sand.u32 %s63, 1
        %s156 = scalar_lea.sflag [#allocation6], %s155
        %s157 = sand.u32 %s63, 1
        %s158 = smul.addr %s157, 6
        %s159 = scalar_lea.vmem [#allocation7], %s158
        // Predicated region
        $region29: #{tpu_custom_call.1} parent=23 // pred_check
          %p160 = pneg %p73
        $region30: #{tpu_custom_call.1} parent=23 // pred_check_branch
          %162 = sbr.rel (%p160) target = $region32
        $region31: #{tpu_custom_call.1} parent=23 // pred_region
          %164 = vsyncadd %s156, 0
          %s165 = smul.addr %s27, 2
          %s166 = scalar_lea.hbm %s2, %s165
          %s167 = sshll.u32 %s159, 4
          %s168 = int_to_ptr.vmem [resolvable:$true] %s167
          %s169 = sshll.u32 %s166, 4
          %s170 = int_to_ptr.hbm [resolvable:$true] %s169
          %175 = dma.vmem_to_hbm [thread:$0]  %s168, 96, %s170, %s156, 32, 64, 2
        $region32: #{tpu_custom_call.1} parent=23 // pred_fallthru
          _
      $region24: #{tpu_custom_call.1} parent=5 // pred_fallthru
        _
      %p176 = scmp.le.s32.totalorder 2, %s22
      // Predicated region
      $region33: #{tpu_custom_call.1} parent=5 // pred_check
        %p177 = pneg %p176
      $region34: #{tpu_custom_call.1} parent=5 // pred_check_branch
        %179 = sbr.rel (%p177) target = $region36
      $region35: #{tpu_custom_call.1} parent=5 // pred_region
        %s180 = ssub.s32 %s22, 2
        // Predicated region
        $region37: #{tpu_custom_call.1} parent=35 // pred_check
          %p181 = pneg %p79
        $region38: #{tpu_custom_call.1} parent=35 // pred_check_branch
          %183 = sbr.rel (%p181) target = $region40
        $region39: #{tpu_custom_call.1} parent=35 // pred_region
          %s184 = sand.u32 %s64, 1
          %s185 = scalar_lea.sflag [#allocation6], %s184
          %s186 = sand.u32 %s64, 1
          %s187 = smul.addr %s186, 6
          %s188 = scalar_lea.vmem [#allocation7], %s187
          %190 = dma.done %s185, 96
        $region40: #{tpu_custom_call.1} parent=35 // pred_fallthru
          _
      $region36: #{tpu_custom_call.1} parent=5 // pred_fallthru
        _
    $region6: #{tpu_custom_call.1} parent=1 // loop_footer
      %s26 = sadd.s32 1, %s22
    $region7: #{tpu_custom_call.1} parent=1 // loop_footer_branch
      %21 = sbr.rel target = $region3
    $region8: #{tpu_custom_call.1} parent=1 // loop_exit
      _
    %191 = vsyncpa [#allocation5], 1
    %s192 = scalar_lea.sflag [#allocation5], 1
    %193 = vsyncpa %s192, 1
    %194 = vsyncpa [#allocation6], 1
    %s195 = scalar_lea.sflag [#allocation6], 1
    %196 = vsyncpa %s195, 1

</llo_original>
